<compile_context>
chip_gen: v7x
topology: tpu7x:2x2x1
jax: 0.10.0
libtpu: 0.0.40
codegen_flags: <defaults>
</compile_context>

<pallas_src>
import functools

import jax
import jax.numpy as jnp
from jax import lax
from jax.experimental import pallas as pl
from jax.experimental.pallas import tpu as pltpu

FLAT = 3 * 32 * 32  # 3072, hard-coded by the PyTorch module

_VMEM = pl.BlockSpec(memory_space=pltpu.MemorySpace.VMEM)


def _round_up(v, m):
    return ((v + m - 1) // m) * m


def _is_two_core_chip():
    """v7x-like chips expose ~64 MiB VMEM per TensorCore and have 2 TCs/chip;
    v5e/v6e report 128 MiB and have a single TC."""
    try:
        cap = int(getattr(pltpu.get_tpu_info(), "vmem_capacity_bytes", 0))
    except Exception:
        return False
    return 0 < cap <= 80 * 2**20


# ------------------------------ selfmasking -----------------------------------

def _selfmask_kernel(z_ref, w_ref, b_ref, o_ref):
    # z: (B, FLAT); w/b: (1, FLAT) broadcast over batch (softplus pre-folded).
    o_ref[...] = (-w_ref[...] * (z_ref[...] - b_ref[...])).astype(o_ref.dtype)


def selfmask(z_flat, w_eff, b):
    return pl.pallas_call(
        _selfmask_kernel,
        out_shape=jax.ShapeDtypeStruct(z_flat.shape, z_flat.dtype),
        in_specs=[_VMEM] * 3,
        out_specs=_VMEM,
    )(z_flat, w_eff, b)


# -------------------------------- 'linear' ------------------------------------

def _matmul_bias_kernel(x_ref, w_ref, b_ref, o_ref):
    # Single-K-step matmul: no accumulator scratch, bias folded in the epilogue.
    o_ref[...] = (jnp.dot(x_ref[...], w_ref[...],
                          preferred_element_type=jnp.float32)
                  + b_ref[...]).astype(o_ref.dtype)


def linear_forward(x, w, b):
    """out = x @ w + b;  x (M,K) f32, w (K,N) bf16 (weight stream), b (1,N) f32."""
    M, K = x.shape
    _, N = w.shape
    Mp = _round_up(M, 8)                       # keep sublanes full for the MXU/vst
    xb = x.astype(w.dtype)
    if Mp != M:
        xb = jnp.pad(xb, ((0, Mp - M), (0, 0)))
    b = b.astype(jnp.float32)

    if _is_two_core_chip() and N % 256 == 0:
        # 2-TC chip: split N in two "parallel" blocks so each TensorCore streams
        # half the weight (~9.4 MiB/block double-buffered, well under 48 MiB).
        tn = N // 2
        out = pl.pallas_call(
            _matmul_bias_kernel,
            out_shape=jax.ShapeDtypeStruct((Mp, N), jnp.float32),
            grid_spec=pltpu.PrefetchScalarGridSpec(
                num_scalar_prefetch=0,
                grid=(2,),
                in_specs=[pl.BlockSpec((Mp, K), lambda j: (0, 0)),
                          pl.BlockSpec((K, tn), lambda j: (0, j)),
                          pl.BlockSpec((1, tn), lambda j: (0, j))],
                out_specs=pl.BlockSpec((Mp, tn), lambda j: (0, j))),
            compiler_params=pltpu.CompilerParams(
                dimension_semantics=("parallel",),
                vmem_limit_bytes=48 * 2**20),
        )(xb, w, b)
    else:
        # 1-TC chips (v5e/v6e): the whole (K,N) weight is ONE fully contiguous
        # DMA (18.9 MiB bf16 for 3072x3072).  At M=8 compute is negligible so
        # nothing is lost by not pipelining, and DMA efficiency is maximal.
        wbytes = K * N * w.dtype.itemsize
        out = pl.pallas_call(
            _matmul_bias_kernel,
            out_shape=jax.ShapeDtypeStruct((Mp, N), jnp.float32),
            in_specs=[_VMEM] * 3,
            out_specs=_VMEM,
            compiler_params=pltpu.CompilerParams(
                vmem_limit_bytes=int(wbytes + 12 * 2**20)),
        )(xb, w, b)
    return out[:M] if Mp != M else out


# ------------------------------- 'nonlinear' ----------------------------------

def _nonlinear_fused_kernel(x_ref, w1_ref, b1_ref, w2_ref, b2_ref, o_ref):
    # tanh(x@w1+b1)@w2 + b2 entirely in VMEM (both weights ~0.75 MiB bf16).
    h = jnp.tanh(jnp.dot(x_ref[...], w1_ref[...],
                         preferred_element_type=jnp.float32) + b1_ref[...])
    o_ref[...] = (jnp.dot(h.astype(w2_ref.dtype), w2_ref[...],
                          preferred_element_type=jnp.float32)
                  + b2_ref[...]).astype(o_ref.dtype)


def nonlinear_forward(x, w1, b1, w2, b2):
    M, K = x.shape
    N = w2.shape[1]
    Mp = _round_up(M, 8)
    xb = x.astype(w1.dtype)
    if Mp != M:
        xb = jnp.pad(xb, ((0, Mp - M), (0, 0)))
    out = pl.pallas_call(
        _nonlinear_fused_kernel,
        out_shape=jax.ShapeDtypeStruct((Mp, N), jnp.float32),
        in_specs=[_VMEM] * 5,
        out_specs=_VMEM,
        compiler_params=pltpu.CompilerParams(vmem_limit_bytes=16 * 2**20),
    )(xb, w1, b1.astype(jnp.float32), w2, b2.astype(jnp.float32))
    return out[:M] if Mp != M else out


# -------------------------- conv helpers (padded grid) -------------------------

def _tap_offsets(pw):
    # flat-grid offset of tap (dy, dx): (dy-1)*pw + (dx-1), dy/dx in {0,1,2}
    return tuple((dy - 1) * pw + (dx - 1) for dy in range(3) for dx in range(3))


def _to_padded_grid(z, ph, pw, rows_pad, mpr):
    """z (B,C,H,W) -> (rows_pad, mpr) f32 on the zero-padded grid
    (col = b*ph*pw + y*pw + x); halo and lane-tail columns are zero."""
    B, C, H, W = z.shape
    zp = jnp.pad(z, ((0, 0), (0, 0), (1, 1), (1, 1)))
    flat = jnp.transpose(zp, (1, 0, 2, 3)).reshape(C, B * ph * pw)
    return jnp.zeros((rows_pad, mpr), jnp.float32).at[:C, :B * ph * pw].set(flat)


def _stack_tap_weights(w_oihw, cin_pad):
    """(Cout, Cin, 3, 3) -> (9*8, cin_pad); tap t occupies sublanes [8t, 8t+Cout)."""
    Cout, Cin = w_oihw.shape[:2]
    wt = jnp.transpose(w_oihw, (2, 3, 0, 1)).reshape(9, Cout, Cin)
    wt = jnp.pad(wt, ((0, 0), (0, 8 - Cout), (0, cin_pad - Cin)))
    return wt.reshape(9 * 8, cin_pad).astype(jnp.float32)


def _shift_add_taps(r, out_shape, offsets, mpr):
    """out[:, m] = sum_t r[8t:8t+8, m + off_t]  via cheap (8, MPR) lane rolls."""
    acc = jnp.zeros(out_shape, jnp.float32)
    for t, off in enumerate(offsets):
        blk = r[8 * t:8 * t + 8, :]               # sublane-aligned static slice
        s = (-off) % mpr
        if s:
            blk = pltpu.roll(blk, s, axis=1)
        acc = acc + blk
    return acc


# ---------------------------------- 'conv' -------------------------------------

def _conv_roll_kernel(x_ref, w_ref, b_ref, o_ref, *, offsets, mpr):
    # x: (cin_pad, MPR) on the zero-padded grid; w: (72, cin_pad); o: (8, MPR)
    r = jnp.dot(w_ref[...], x_ref[...], preferred_element_type=jnp.float32)
    acc = _shift_add_taps(r, o_ref.shape, offsets, mpr)
    o_ref[...] = (acc + b_ref[...]).astype(o_ref.dtype)


def conv3x3_same_nchw(z, w_oihw, bias):
    """Single 3x3 SAME conv (NCHW) as one matmul + nine output rolls."""
    B, Cin, H, W = z.shape
    Cout = w_oihw.shape[0]
    PH, PW = H + 2, W + 2
    MP = B * PH * PW
    MPR = _round_up(MP, 128)
    CinP = _round_up(max(Cin, 8), 8)

    xg = _to_padded_grid(z, PH, PW, CinP, MPR)
    wall = _stack_tap_weights(w_oihw, CinP)
    b8 = jnp.zeros((8, 1), jnp.float32).at[:Cout, 0].set(bias.astype(jnp.float32))

    out8 = pl.pallas_call(
        functools.partial(_conv_roll_kernel, offsets=_tap_offsets(PW), mpr=MPR),
        out_shape=jax.ShapeDtypeStruct((8, MPR), jnp.float32),
        in_specs=[_VMEM] * 3,
        out_specs=_VMEM,
        compiler_params=pltpu.CompilerParams(vmem_limit_bytes=16 * 2**20),
    )(xg, wall, b8)

    out = out8[:Cout, :MP].reshape(Cout, B, PH, PW)[:, :, 1:H + 1, 1:W + 1]
    return jnp.transpose(out, (1, 0, 2, 3))


# ---------------------------------- '2conv' ------------------------------------

def _im2col_padded_grid(z, ph, pw):
    """3x3 taps of z evaluated on the padded output grid -> (9*Cin, B*ph*pw)."""
    B, C, H, W = z.shape
    zp = jnp.pad(z, ((0, 0), (0, 0), (2, 2), (2, 2)))
    taps = [zp[:, :, dy:dy + ph, dx:dx + pw] for dy in range(3) for dx in range(3)]
    cols = jnp.stack(taps, axis=0)                    # (9, B, C, ph, pw)
    cols = jnp.transpose(cols, (0, 2, 1, 3, 4))       # (9, C, B, ph, pw)
    return cols.reshape(9 * C, B * ph * pw)


def _fused_2conv_kernel(xcol_ref, w1_ref, b1_ref, w2_ref, b2_ref, o_ref,
                        *, ph, pw, mp, offsets, mpr):
    # ---- conv1 (single K-padded matmul) + bias + tanh on the padded grid ----
    h = jnp.tanh(jnp.dot(w1_ref[...], xcol_ref[...],
                         preferred_element_type=jnp.float32) + b1_ref[...])

    # zero the spatial halo AND the lane tail so conv2 sees SAME zero padding
    col = lax.broadcasted_iota(jnp.int32, (1, mpr), 1)
    within = col % (ph * pw)
    yy = within // pw
    xx = within % pw
    interior = ((yy >= 1) & (yy <= ph - 2) & (xx >= 1) & (xx <= pw - 2)
                & (col < mp))
    h = jnp.where(interior, h, 0.0)

    # ---- conv2: ONE matmul with the 9 taps stacked sublane-wise, then ----
    # ---- shift-and-add the small (8, MPR) per-tap blocks with lane rolls ----
    r = jnp.dot(w2_ref[...], h, preferred_element_type=jnp.float32)   # (72, MPR)
    acc = _shift_add_taps(r, o_ref.shape, offsets, mpr)
    o_ref[...] = (acc + b2_ref[...]).astype(o_ref.dtype)


def conv3x3_2conv_fused(z, w1, b1, w2, b2):
    """'2conv' branch: conv1 + tanh + conv2 in a single fused Pallas kernel."""
    B, Cin, H, W = z.shape
    Cmid = w1.shape[0]
    Cout = w2.shape[0]
    PH, PW = H + 2, W + 2
    MP = B * PH * PW
    MPR = _round_up(MP, 128)
    K = 9 * Cin
    KP = _round_up(max(K, 32), 8)                     # pad tiny contraction 27 -> 32

    cols = _im2col_padded_grid(z, PH, PW)             # (27, MP) -- small
    xcol = jnp.zeros((KP, MPR), jnp.float32).at[:K, :MP].set(cols)
    w1c = jnp.transpose(w1, (0, 2, 3, 1)).reshape(Cmid, K)   # (dy, dx, ci) order
    w1c = jnp.pad(w1c, ((0, 0), (0, KP - K))).astype(jnp.float32)
    w2all = _stack_tap_weights(w2, Cmid)              # (72, Cmid), Cout padded to 8
    b1c = b1.reshape(Cmid, 1).astype(jnp.float32)
    b2c = jnp.zeros((8, 1), jnp.float32).at[:Cout, 0].set(b2.astype(jnp.float32))

    out8 = pl.pallas_call(
        functools.partial(_fused_2conv_kernel, ph=PH, pw=PW, mp=MP,
                          offsets=_tap_offsets(PW), mpr=MPR),
        out_shape=jax.ShapeDtypeStruct((8, MPR), jnp.float32),
        in_specs=[_VMEM] * 5,
        out_specs=_VMEM,
        compiler_params=pltpu.CompilerParams(vmem_limit_bytes=32 * 2**20),
    )(xcol, w1c, b1c, w2all, b2c)

    out = out8[:Cout, :MP].reshape(Cout, B, PH, PW)[:, :, 1:H + 1, 1:W + 1]
    return jnp.transpose(out, (1, 0, 2, 3))


# ----------------------------------- Module -----------------------------------

class BernoulliDecoderLinearMissPallas:
    def __init__(self, n_hidden, missing_process, key):
        self.n_hidden = n_hidden
        self.missing_process = missing_process
        ks = jax.random.split(key, 4)
        s = 0.02  # deterministic synthetic init (not a checkpoint load)
        if missing_process == 'linear':
            # big weight streamed as bf16 (HBM-bound branch); bias stays f32
            self.w1 = (jax.random.normal(ks[0], (FLAT, FLAT), jnp.float32) * s
                       ).astype(jnp.bfloat16)
            self.b1 = jax.random.normal(ks[1], (1, FLAT), jnp.float32) * s
        elif missing_process == 'nonlinear':
            self.w1 = (jax.random.normal(ks[0], (FLAT, n_hidden), jnp.float32) * s
                       ).astype(jnp.bfloat16)
            self.b1 = jax.random.normal(ks[1], (1, n_hidden), jnp.float32) * s
            self.w2 = (jax.random.normal(ks[2], (n_hidden, FLAT), jnp.float32) * s
                       ).astype(jnp.bfloat16)
            self.b2 = jax.random.normal(ks[3], (1, FLAT), jnp.float32) * s
        elif missing_process in ('selfmasking', 'selfmasking_known'):
            self.W = jax.random.normal(ks[0], (1, FLAT), jnp.float32)
            self.b = jax.random.normal(ks[1], (1, FLAT), jnp.float32)
            # softplus folded once at init for the 'known' variant
            self.W_eff = (jax.nn.softplus(self.W)
                          if missing_process == 'selfmasking_known' else self.W)
        elif missing_process == 'conv':
            self.w1 = jax.random.normal(ks[0], (3, 3, 3, 3), jnp.float32) * s  # OIHW
            self.b1 = jax.random.normal(ks[1], (3,), jnp.float32) * s
        elif missing_process == '2conv':
            self.w1 = jax.random.normal(ks[0], (n_hidden, 3, 3, 3), jnp.float32) * s
            self.b1 = jax.random.normal(ks[1], (n_hidden,), jnp.float32) * s
            self.w2 = jax.random.normal(ks[2], (3, n_hidden, 3, 3), jnp.float32) * s
            self.b2 = jax.random.normal(ks[3], (3,), jnp.float32) * s
        else:
            raise ValueError(missing_process)

    def __call__(self, z):  # z: (B, 3, 32, 32) NCHW float32
        B = z.shape[0]
        mp = self.missing_process
        if mp in ('selfmasking', 'selfmasking_known'):
            logits = selfmask(z.reshape(B, -1), self.W_eff, self.b)
        elif mp == 'linear':
            logits = linear_forward(z.reshape(B, -1), self.w1, self.b1)
        elif mp == 'nonlinear':
            logits = nonlinear_forward(z.reshape(B, -1), self.w1, self.b1,
                                       self.w2, self.b2)
        elif mp == 'conv':
            return conv3x3_same_nchw(z, self.w1, self.b1)
        elif mp == '2conv':
            return conv3x3_2conv_fused(z, self.w1, self.b1, self.w2, self.b2)
        return logits.reshape(B, 3, 32, 32)


# ------------------------------ pure-JAX reference -----------------------------

def reference_forward(m, z):
    B = z.shape[0]
    mp = m.missing_process
    zf = z.reshape(B, -1)
    dn = ('NCHW', 'OIHW', 'NCHW')
    if mp == 'selfmasking':
        logits = -m.W * (zf - m.b)
    elif mp == 'selfmasking_known':
        logits = -jax.nn.softplus(m.W) * (zf - m.b)
    elif mp == 'linear':
        zq = zf.astype(jnp.bfloat16).astype(jnp.float32)
        logits = zq @ m.w1.astype(jnp.float32) + m.b1
    elif mp == 'nonlinear':
        zq = zf.astype(jnp.bfloat16).astype(jnp.float32)
        h = jnp.tanh(zq @ m.w1.astype(jnp.float32) + m.b1)
        hq = h.astype(jnp.bfloat16).astype(jnp.float32)
        logits = hq @ m.w2.astype(jnp.float32) + m.b2
    elif mp == 'conv':
        o = lax.conv_general_dilated(z, m.w1, (1, 1), 'SAME', dimension_numbers=dn)
        return o + m.b1.reshape(1, -1, 1, 1)
    elif mp == '2conv':
        h = jnp.tanh(lax.conv_general_dilated(z, m.w1, (1, 1), 'SAME',
                                              dimension_numbers=dn)
                     + m.b1.reshape(1, -1, 1, 1))
        o = lax.conv_general_dilated(h, m.w2, (1, 1), 'SAME', dimension_numbers=dn)
        return o + m.b2.reshape(1, -1, 1, 1)
    return logits.reshape(B, 3, 32, 32)


# ------------------------------------- main ------------------------------------

if __name__ == "__main__":
    key = jax.random.PRNGKey(0)
    kz, kp = jax.random.split(key)
    z = jax.random.normal(kz, (2, 3, 32, 32), jnp.float32)   # batch=2, CIFAR-sized

    for mp_name in ('selfmasking', 'selfmasking_known', 'linear', 'nonlinear',
                    'conv', '2conv'):
        model = BernoulliDecoderLinearMissPallas(n_hidden=128,
                                                 missing_process=mp_name, key=kp)
        out = jax.block_until_ready(model(z))
        assert out.shape == (2, 3, 32, 32), (mp_name, out.shape)
        ref = reference_forward(model, z)
        if not jnp.allclose(out, ref, rtol=5e-3, atol=5e-3):
            raise AssertionError(
                f"mismatch for {mp_name}: "
                f"max abs diff = {float(jnp.max(jnp.abs(out - ref)))}")

    print("KERNEL_OK")
</pallas_src>

<mosaic_0001>
module attributes {stable_mosaic.version = 11 : i64} {
  func.func @_selfmask_kernel(%arg0: memref<2x3072xf32, #tpu.memory_space<vmem>>, %arg1: memref<1x3072xf32, #tpu.memory_space<vmem>>, %arg2: memref<1x3072xf32, #tpu.memory_space<vmem>>, %arg3: memref<2x3072xf32, #tpu.memory_space<vmem>>) attributes {dimension_semantics = [], scalar_prefetch = 0 : i64, scratch_operands = 0 : i64, tpu.core_type = #tpu.core_type<tc>} {
    %c0 = arith.constant 0 : index
    %c0_0 = arith.constant 0 : index
    %0 = vector.load %arg1[%c0, %c0_0] : memref<1x3072xf32, #tpu.memory_space<vmem>>, vector<1x3072xf32>
    %cst = arith.constant 0.000000e+00 : f32
    %1 = vector.broadcast %cst : f32 to vector<1x3072xf32>
    %2 = arith.subf %1, %0 : vector<1x3072xf32>
    %c0_1 = arith.constant 0 : index
    %c0_2 = arith.constant 0 : index
    %3 = vector.load %arg0[%c0_1, %c0_2] : memref<2x3072xf32, #tpu.memory_space<vmem>>, vector<2x3072xf32>
    %c0_3 = arith.constant 0 : index
    %c0_4 = arith.constant 0 : index
    %4 = vector.load %arg2[%c0_3, %c0_4] : memref<1x3072xf32, #tpu.memory_space<vmem>>, vector<1x3072xf32>
    %5 = vector.broadcast %4 : vector<1x3072xf32> to vector<2x3072xf32>
    %6 = arith.subf %3, %5 : vector<2x3072xf32>
    %7 = vector.broadcast %2 : vector<1x3072xf32> to vector<2x3072xf32>
    %8 = arith.mulf %7, %6 : vector<2x3072xf32>
    %c0_5 = arith.constant 0 : index
    %c0_6 = arith.constant 0 : index
    %9 = vector.load %arg3[%c0_5, %c0_6] : memref<2x3072xf32, #tpu.memory_space<vmem>>, vector<2x3072xf32>
    tpu.vector_store %arg3[%c0_5, %c0_6], %8 {strides = array<i32>} : memref<2x3072xf32, #tpu.memory_space<vmem>>, vector<2x3072xf32>,
    return
  }
}

</mosaic_0001>

<llo_original>
// kernel: tpu_custom_call.1
$region0: #{tpu_custom_call.1}
  #allocation0 [shape = 'u32[]', space=smem, size = 0x4, offset = 0x4, fixed_abs, tag = 'smem constant byte address 0x4 - core index']
  #allocation1 [shape = 'u32[144,128]{1,0:T(1,128)}', space=vmem, size = 0x12000, scoped, tag = 'internal scratch']
  %s0 = inlined_call_operand.hbm [shape: f32[2,3072], index: 0, kind: input, shape index: {}]
  %s1 = inlined_call_operand.hbm [shape: f32[1,3072], index: 1, kind: input, shape index: {}]
  %s2 = inlined_call_operand.hbm [shape: f32[1,3072], index: 2, kind: input, shape index: {}]
  %s3 = inlined_call_operand.hbm [shape: f32[2,3072], index: 3, kind: output, shape index: {}]
  %s4 = sld [smem:[#allocation0]]
  $region34: #{tpu_custom_call.1} parent=0
    _
  %s6 = ssub.s32 1, %s4
  %s7 = scalar_select 0, %s6, %s4
  $region1: #{tpu_custom_call.1} parent=0
    #allocation2 [shape = 'u8[24576]{0}', space=vmem, size = 0x6000, scoped, tag = 'input window, operand 0, single buffered']
    #allocation3 [shape = 's32[1]{0}', space=sflag, size = 0x4, scoped, tag = 'scoped memory for tpu_custom_call.1']
    #allocation4 [shape = 's32[1]{0}', space=sflag, size = 0x4, scoped, tag = 'scoped memory for tpu_custom_call.1']
    #allocation5 [shape = 'u8[12288]{0}', space=vmem, size = 0x3000, scoped, tag = 'input window, operand 1, single buffered']
    #allocation6 [shape = 's32[1]{0}', space=sflag, size = 0x4, scoped, tag = 'scoped memory for tpu_custom_call.1']
    #allocation7 [shape = 'u8[12288]{0}', space=vmem, size = 0x3000, scoped, tag = 'input window, operand 2, single buffered']
    #allocation8 [shape = 'u8[24576]{0}', space=vmem, size = 0x6000, scoped, tag = 'output window, operand 0, single buffered']
    %8 = vsyncpa [#allocation3], 0
    %9 = vsyncpa [#allocation6], 0
    %10 = vsyncpa [#allocation4], 0
    // Predicated region
    $region2: #{tpu_custom_call.1} parent=1 // pred_check
      _
    $region3: #{tpu_custom_call.1} parent=1 // pred_check_branch
      %12 = sbr.rel (0) target = $region5
    $region4: #{tpu_custom_call.1} parent=1 // pred_region
      %s14 = ssub.s32 768, 768
      %15 = vsyncadd [#allocation3], %s14
      %s17 = sshll.u32 [#allocation2], 4
      %s18 = int_to_ptr.vmem [resolvable:$true] %s17
      %20 = dma.hbm_to_vmem [thread:$0]  %s0, 768, %s18, [#allocation3]
    $region5: #{tpu_custom_call.1} parent=1 // pred_fallthru
      _
    // Predicated region
    $region6: #{tpu_custom_call.1} parent=1 // pred_check
      _
    $region7: #{tpu_custom_call.1} parent=1 // pred_check_branch
      %22 = sbr.rel (0) target = $region9
    $region8: #{tpu_custom_call.1} parent=1 // pred_region
      %s24 = ssub.s32 384, 384
      %25 = vsyncadd [#allocation6], %s24
      %s27 = sshll.u32 [#allocation5], 4
      %s28 = int_to_ptr.vmem [resolvable:$true] %s27
      %30 = dma.hbm_to_vmem [thread:$0]  %s1, 384, %s28, [#allocation6]
    $region9: #{tpu_custom_call.1} parent=1 // pred_fallthru
      _
    // Predicated region
    $region10: #{tpu_custom_call.1} parent=1 // pred_check
      _
    $region11: #{tpu_custom_call.1} parent=1 // pred_check_branch
      %32 = sbr.rel (0) target = $region13
    $region12: #{tpu_custom_call.1} parent=1 // pred_region
      %s34 = ssub.s32 384, 384
      %35 = vsyncadd [#allocation6], %s34
      %s37 = sshll.u32 [#allocation7], 4
      %s38 = int_to_ptr.vmem [resolvable:$true] %s37
      %40 = dma.hbm_to_vmem [thread:$0]  %s2, 384, %s38, [#allocation6]
    $region13: #{tpu_custom_call.1} parent=1 // pred_fallthru
      _
    // Predicated region
    $region14: #{tpu_custom_call.1} parent=1 // pred_check
      _
    $region15: #{tpu_custom_call.1} parent=1 // pred_check_branch
      %42 = sbr.rel (0) target = $region17
    $region16: #{tpu_custom_call.1} parent=1 // pred_region
      %43 = dma.done [#allocation3], 768
    $region17: #{tpu_custom_call.1} parent=1 // pred_fallthru
      _
    // Predicated region
    $region18: #{tpu_custom_call.1} parent=1 // pred_check
      _
    $region19: #{tpu_custom_call.1} parent=1 // pred_check_branch
      %45 = sbr.rel (0) target = $region21
    $region20: #{tpu_custom_call.1} parent=1 // pred_region
      %46 = dma.done [#allocation6], 384
    $region21: #{tpu_custom_call.1} parent=1 // pred_fallthru
      _
    // Predicated region
    $region22: #{tpu_custom_call.1} parent=1 // pred_check
      _
    $region23: #{tpu_custom_call.1} parent=1 // pred_check_branch
      %48 = sbr.rel (0) target = $region25
    $region24: #{tpu_custom_call.1} parent=1 // pred_region
      %49 = dma.done [#allocation6], 384
    $region25: #{tpu_custom_call.1} parent=1 // pred_fallthru
      _
    %v50 = vld [vmem:[#allocation5] sm:$0xff]
    %v51 = vld [vmem:[#allocation5 + $0x8] sm:$0xff]
    %v52 = vld [vmem:[#allocation5 + $0x10] sm:$0xff]
    %v53 = vsub.f32 0.0, %v50
    %v54 = vsub.f32 0.0, %v51
    %v55 = vsub.f32 0.0, %v52
    %v56 = vld [vmem:[#allocation2] sm:$0xff]
    %v57 = vld [vmem:[#allocation2 + $0x8] sm:$0xff]
    %v58 = vld [vmem:[#allocation2 + $0x10] sm:$0xff]
    %v59 = vld [vmem:[#allocation2 + $0x18] sm:$0xff]
    %v60 = vld [vmem:[#allocation2 + $0x20] sm:$0xff]
    %v61 = vld [vmem:[#allocation2 + $0x28] sm:$0xff]
    %v62 = vld [vmem:[#allocation7] sm:$0xff]
    %v63 = vld [vmem:[#allocation7 + $0x8] sm:$0xff]
    %v64 = vld [vmem:[#allocation7 + $0x10] sm:$0xff]
    %v68 = vlaneseq
    %v69 = vshrl.u32 %v68, 7
    %v70 = vsub.s32 0, %v69
    %v71 = vrot.slane %v62, %v70
    %v72 = vlaneseq
    %v73 = vshrl.u32 %v72, 7
    %v74 = vsub.s32 1, %v73
    %v75 = vrot.slane %v62, %v74
    %v76 = vlaneseq
    %v77 = vshrl.u32 %v76, 7
    %v78 = vsub.s32 2, %v77
    %v79 = vrot.slane %v62, %v78
    %v80 = vlaneseq
    %v81 = vshrl.u32 %v80, 7
    %v82 = vsub.s32 3, %v81
    %v83 = vrot.slane %v62, %v82
    %v84 = vlaneseq
    %v85 = vshrl.u32 %v84, 7
    %v86 = vsub.s32 4, %v85
    %v87 = vrot.slane %v62, %v86
    %v88 = vlaneseq
    %v89 = vshrl.u32 %v88, 7
    %v90 = vsub.s32 5, %v89
    %v91 = vrot.slane %v62, %v90
    %v92 = vlaneseq
    %v93 = vshrl.u32 %v92, 7
    %v94 = vsub.s32 6, %v93
    %v95 = vrot.slane %v62, %v94
    %v96 = vlaneseq
    %v97 = vshrl.u32 %v96, 7
    %v98 = vsub.s32 7, %v97
    %v99 = vrot.slane %v62, %v98
    %v100 = vlaneseq
    %v101 = vshrl.u32 %v100, 7
    %v102 = vsub.s32 0, %v101
    %v103 = vrot.slane %v63, %v102
    %v104 = vlaneseq
    %v105 = vshrl.u32 %v104, 7
    %v106 = vsub.s32 1, %v105
    %v107 = vrot.slane %v63, %v106
    %v108 = vlaneseq
    %v109 = vshrl.u32 %v108, 7
    %v110 = vsub.s32 2, %v109
    %v111 = vrot.slane %v63, %v110
    %v112 = vlaneseq
    %v113 = vshrl.u32 %v112, 7
    %v114 = vsub.s32 3, %v113
    %v115 = vrot.slane %v63, %v114
    %v116 = vlaneseq
    %v117 = vshrl.u32 %v116, 7
    %v118 = vsub.s32 4, %v117
    %v119 = vrot.slane %v63, %v118
    %v120 = vlaneseq
    %v121 = vshrl.u32 %v120, 7
    %v122 = vsub.s32 5, %v121
    %v123 = vrot.slane %v63, %v122
    %v124 = vlaneseq
    %v125 = vshrl.u32 %v124, 7
    %v126 = vsub.s32 6, %v125
    %v127 = vrot.slane %v63, %v126
    %v128 = vlaneseq
    %v129 = vshrl.u32 %v128, 7
    %v130 = vsub.s32 7, %v129
    %v131 = vrot.slane %v63, %v130
    %v132 = vlaneseq
    %v133 = vshrl.u32 %v132, 7
    %v134 = vsub.s32 0, %v133
    %v135 = vrot.slane %v64, %v134
    %v136 = vlaneseq
    %v137 = vshrl.u32 %v136, 7
    %v138 = vsub.s32 1, %v137
    %v139 = vrot.slane %v64, %v138
    %v140 = vlaneseq
    %v141 = vshrl.u32 %v140, 7
    %v142 = vsub.s32 2, %v141
    %v143 = vrot.slane %v64, %v142
    %v144 = vlaneseq
    %v145 = vshrl.u32 %v144, 7
    %v146 = vsub.s32 3, %v145
    %v147 = vrot.slane %v64, %v146
    %v148 = vlaneseq
    %v149 = vshrl.u32 %v148, 7
    %v150 = vsub.s32 4, %v149
    %v151 = vrot.slane %v64, %v150
    %v152 = vlaneseq
    %v153 = vshrl.u32 %v152, 7
    %v154 = vsub.s32 5, %v153
    %v155 = vrot.slane %v64, %v154
    %v156 = vlaneseq
    %v157 = vshrl.u32 %v156, 7
    %v158 = vsub.s32 6, %v157
    %v159 = vrot.slane %v64, %v158
    %v160 = vlaneseq
    %v161 = vshrl.u32 %v160, 7
    %v162 = vsub.s32 7, %v161
    %v163 = vrot.slane %v64, %v162
    %v164 = vcombine.low %v71, %v75
    %v165 = vcombine.low %v79, %v83
    %v167 = vunpack.c.l.s4 1983009808
    %v168 = vunpack.c.0.s8 %v167
    %v169 = vlaneseq
    %v170 = vshrl.u32 %v169, 7
    %v171 = vsub.s32 %v168, %v170
    %v172 = vrot.slane %v164, %v171
    %v174 = vunpack.c.l.s4 1983009808
    %v175 = vunpack.c.0.s8 %v174
    %v176 = vlaneseq
    %v177 = vshrl.u32 %v176, 7
    %v178 = vsub.s32 %v175, %v177
    %v179 = vrot.slane %v165, %v178
    %v180 = vcombine.low %v172, %v179
    %v181 = vcombine.low %v87, %v91
    %v182 = vcombine.low %v95, %v99
    %v184 = vunpack.c.l.s4 1983009808
    %v185 = vunpack.c.0.s8 %v184
    %v186 = vlaneseq
    %v187 = vshrl.u32 %v186, 7
    %v188 = vsub.s32 %v185, %v187
    %v189 = vrot.slane %v181, %v188
    %v191 = vunpack.c.l.s4 1983009808
    %v192 = vunpack.c.0.s8 %v191
    %v193 = vlaneseq
    %v194 = vshrl.u32 %v193, 7
    %v195 = vsub.s32 %v192, %v194
    %v196 = vrot.slane %v182, %v195
    %v197 = vcombine.low %v189, %v196
    %v198 = vcombine.low %v103, %v107
    %v199 = vcombine.low %v111, %v115
    %v201 = vunpack.c.l.s4 1983009808
    %v202 = vunpack.c.0.s8 %v201
    %v203 = vlaneseq
    %v204 = vshrl.u32 %v203, 7
    %v205 = vsub.s32 %v202, %v204
    %v206 = vrot.slane %v198, %v205
    %v208 = vunpack.c.l.s4 1983009808
    %v209 = vunpack.c.0.s8 %v208
    %v210 = vlaneseq
    %v211 = vshrl.u32 %v210, 7
    %v212 = vsub.s32 %v209, %v211
    %v213 = vrot.slane %v199, %v212
    %v214 = vcombine.low %v206, %v213
    %v215 = vcombine.low %v119, %v123
    %v216 = vcombine.low %v127, %v131
    %v218 = vunpack.c.l.s4 1983009808
    %v219 = vunpack.c.0.s8 %v218
    %v220 = vlaneseq
    %v221 = vshrl.u32 %v220, 7
    %v222 = vsub.s32 %v219, %v221
    %v223 = vrot.slane %v215, %v222
    %v225 = vunpack.c.l.s4 1983009808
    %v226 = vunpack.c.0.s8 %v225
    %v227 = vlaneseq
    %v228 = vshrl.u32 %v227, 7
    %v229 = vsub.s32 %v226, %v228
    %v230 = vrot.slane %v216, %v229
    %v231 = vcombine.low %v223, %v230
    %v232 = vcombine.low %v135, %v139
    %v233 = vcombine.low %v143, %v147
    %v235 = vunpack.c.l.s4 1983009808
    %v236 = vunpack.c.0.s8 %v235
    %v237 = vlaneseq
    %v238 = vshrl.u32 %v237, 7
    %v239 = vsub.s32 %v236, %v238
    %v240 = vrot.slane %v232, %v239
    %v242 = vunpack.c.l.s4 1983009808
    %v243 = vunpack.c.0.s8 %v242
    %v244 = vlaneseq
    %v245 = vshrl.u32 %v244, 7
    %v246 = vsub.s32 %v243, %v245
    %v247 = vrot.slane %v233, %v246
    %v248 = vcombine.low %v240, %v247
    %v249 = vcombine.low %v151, %v155
    %v250 = vcombine.low %v159, %v163
    %v252 = vunpack.c.l.s4 1983009808
    %v253 = vunpack.c.0.s8 %v252
    %v254 = vlaneseq
    %v255 = vshrl.u32 %v254, 7
    %v256 = vsub.s32 %v253, %v255
    %v257 = vrot.slane %v249, %v256
    %v259 = vunpack.c.l.s4 1983009808
    %v260 = vunpack.c.0.s8 %v259
    %v261 = vlaneseq
    %v262 = vshrl.u32 %v261, 7
    %v263 = vsub.s32 %v260, %v262
    %v264 = vrot.slane %v250, %v263
    %v265 = vcombine.low %v257, %v264
    %v272 = vsub.f32 %v56, %v180
    %v273 = vsub.f32 %v57, %v197
    %v274 = vsub.f32 %v58, %v214
    %v275 = vsub.f32 %v59, %v231
    %v276 = vsub.f32 %v60, %v248
    %v277 = vsub.f32 %v61, %v265
    %v281 = vlaneseq
    %v282 = vshrl.u32 %v281, 7
    %v283 = vsub.s32 0, %v282
    %v284 = vrot.slane %v53, %v283
    %v285 = vlaneseq
    %v286 = vshrl.u32 %v285, 7
    %v287 = vsub.s32 1, %v286
    %v288 = vrot.slane %v53, %v287
    %v289 = vlaneseq
    %v290 = vshrl.u32 %v289, 7
    %v291 = vsub.s32 2, %v290
    %v292 = vrot.slane %v53, %v291
    %v293 = vlaneseq
    %v294 = vshrl.u32 %v293, 7
    %v295 = vsub.s32 3, %v294
    %v296 = vrot.slane %v53, %v295
    %v297 = vlaneseq
    %v298 = vshrl.u32 %v297, 7
    %v299 = vsub.s32 4, %v298
    %v300 = vrot.slane %v53, %v299
    %v301 = vlaneseq
    %v302 = vshrl.u32 %v301, 7
    %v303 = vsub.s32 5, %v302
    %v304 = vrot.slane %v53, %v303
    %v305 = vlaneseq
    %v306 = vshrl.u32 %v305, 7
    %v307 = vsub.s32 6, %v306
    %v308 = vrot.slane %v53, %v307
    %v309 = vlaneseq
    %v310 = vshrl.u32 %v309, 7
    %v311 = vsub.s32 7, %v310
    %v312 = vrot.slane %v53, %v311
    %v313 = vlaneseq
    %v314 = vshrl.u32 %v313, 7
    %v315 = vsub.s32 0, %v314
    %v316 = vrot.slane %v54, %v315
    %v317 = vlaneseq
    %v318 = vshrl.u32 %v317, 7
    %v319 = vsub.s32 1, %v318
    %v320 = vrot.slane %v54, %v319
    %v321 = vlaneseq
    %v322 = vshrl.u32 %v321, 7
    %v323 = vsub.s32 2, %v322
    %v324 = vrot.slane %v54, %v323
    %v325 = vlaneseq
    %v326 = vshrl.u32 %v325, 7
    %v327 = vsub.s32 3, %v326
    %v328 = vrot.slane %v54, %v327
    %v329 = vlaneseq
    %v330 = vshrl.u32 %v329, 7
    %v331 = vsub.s32 4, %v330
    %v332 = vrot.slane %v54, %v331
    %v333 = vlaneseq
    %v334 = vshrl.u32 %v333, 7
    %v335 = vsub.s32 5, %v334
    %v336 = vrot.slane %v54, %v335
    %v337 = vlaneseq
    %v338 = vshrl.u32 %v337, 7
    %v339 = vsub.s32 6, %v338
    %v340 = vrot.slane %v54, %v339
    %v341 = vlaneseq
    %v342 = vshrl.u32 %v341, 7
    %v343 = vsub.s32 7, %v342
    %v344 = vrot.slane %v54, %v343
    %v345 = vlaneseq
    %v346 = vshrl.u32 %v345, 7
    %v347 = vsub.s32 0, %v346
    %v348 = vrot.slane %v55, %v347
    %v349 = vlaneseq
    %v350 = vshrl.u32 %v349, 7
    %v351 = vsub.s32 1, %v350
    %v352 = vrot.slane %v55, %v351
    %v353 = vlaneseq
    %v354 = vshrl.u32 %v353, 7
    %v355 = vsub.s32 2, %v354
    %v356 = vrot.slane %v55, %v355
    %v357 = vlaneseq
    %v358 = vshrl.u32 %v357, 7
    %v359 = vsub.s32 3, %v358
    %v360 = vrot.slane %v55, %v359
    %v361 = vlaneseq
    %v362 = vshrl.u32 %v361, 7
    %v363 = vsub.s32 4, %v362
    %v364 = vrot.slane %v55, %v363
    %v365 = vlaneseq
    %v366 = vshrl.u32 %v365, 7
    %v367 = vsub.s32 5, %v366
    %v368 = vrot.slane %v55, %v367
    %v369 = vlaneseq
    %v370 = vshrl.u32 %v369, 7
    %v371 = vsub.s32 6, %v370
    %v372 = vrot.slane %v55, %v371
    %v373 = vlaneseq
    %v374 = vshrl.u32 %v373, 7
    %v375 = vsub.s32 7, %v374
    %v376 = vrot.slane %v55, %v375
    %v407 = vcombine.high %v272, %v272
    %v409 = vunpack.c.l.s4 1983009808
    %v410 = vunpack.c.0.s8 %v409
    %v411 = vlaneseq
    %v412 = vshrl.u32 %v411, 7
    %v413 = vsub.s32 %v410, %v412
    %v414 = vrot.slane %v272, %v413
    %v416 = vunpack.c.l.s4 1983009808
    %v417 = vunpack.c.0.s8 %v416
    %v418 = vlaneseq
    %v419 = vshrl.u32 %v418, 7
    %v420 = vsub.s32 %v417, %v419
    %v421 = vrot.slane %v407, %v420
    %v422 = vcombine.high %v414, %v414
    %v423 = vcombine.high %v421, %v421
    %v424 = vcombine.high %v273, %v273
    %v426 = vunpack.c.l.s4 1983009808
    %v427 = vunpack.c.0.s8 %v426
    %v428 = vlaneseq
    %v429 = vshrl.u32 %v428, 7
    %v430 = vsub.s32 %v427, %v429
    %v431 = vrot.slane %v273, %v430
    %v433 = vunpack.c.l.s4 1983009808
    %v434 = vunpack.c.0.s8 %v433
    %v435 = vlaneseq
    %v436 = vshrl.u32 %v435, 7
    %v437 = vsub.s32 %v434, %v436
    %v438 = vrot.slane %v424, %v437
    %v439 = vcombine.high %v431, %v431
    %v440 = vcombine.high %v438, %v438
    %v441 = vcombine.high %v274, %v274
    %v443 = vunpack.c.l.s4 1983009808
    %v444 = vunpack.c.0.s8 %v443
    %v445 = vlaneseq
    %v446 = vshrl.u32 %v445, 7
    %v447 = vsub.s32 %v444, %v446
    %v448 = vrot.slane %v274, %v447
    %v450 = vunpack.c.l.s4 1983009808
    %v451 = vunpack.c.0.s8 %v450
    %v452 = vlaneseq
    %v453 = vshrl.u32 %v452, 7
    %v454 = vsub.s32 %v451, %v453
    %v455 = vrot.slane %v441, %v454
    %v456 = vcombine.high %v448, %v448
    %v457 = vcombine.high %v455, %v455
    %v458 = vcombine.high %v275, %v275
    %v460 = vunpack.c.l.s4 1983009808
    %v461 = vunpack.c.0.s8 %v460
    %v462 = vlaneseq
    %v463 = vshrl.u32 %v462, 7
    %v464 = vsub.s32 %v461, %v463
    %v465 = vrot.slane %v275, %v464
    %v467 = vunpack.c.l.s4 1983009808
    %v468 = vunpack.c.0.s8 %v467
    %v469 = vlaneseq
    %v470 = vshrl.u32 %v469, 7
    %v471 = vsub.s32 %v468, %v470
    %v472 = vrot.slane %v458, %v471
    %v473 = vcombine.high %v465, %v465
    %v474 = vcombine.high %v472, %v472
    %v475 = vcombine.high %v276, %v276
    %v477 = vunpack.c.l.s4 1983009808
    %v478 = vunpack.c.0.s8 %v477
    %v479 = vlaneseq
    %v480 = vshrl.u32 %v479, 7
    %v481 = vsub.s32 %v478, %v480
    %v482 = vrot.slane %v276, %v481
    %v484 = vunpack.c.l.s4 1983009808
    %v485 = vunpack.c.0.s8 %v484
    %v486 = vlaneseq
    %v487 = vshrl.u32 %v486, 7
    %v488 = vsub.s32 %v485, %v487
    %v489 = vrot.slane %v475, %v488
    %v490 = vcombine.high %v482, %v482
    %v491 = vcombine.high %v489, %v489
    %v492 = vcombine.high %v277, %v277
    %v494 = vunpack.c.l.s4 1983009808
    %v495 = vunpack.c.0.s8 %v494
    %v496 = vlaneseq
    %v497 = vshrl.u32 %v496, 7
    %v498 = vsub.s32 %v495, %v497
    %v499 = vrot.slane %v277, %v498
    %v501 = vunpack.c.l.s4 1983009808
    %v502 = vunpack.c.0.s8 %v501
    %v503 = vlaneseq
    %v504 = vshrl.u32 %v503, 7
    %v505 = vsub.s32 %v502, %v504
    %v506 = vrot.slane %v492, %v505
    %v507 = vcombine.high %v499, %v499
    %v508 = vcombine.high %v506, %v506
    %v533 = vmul.f32 %v284, %v414
    %v534 = vmul.f32 %v288, %v422
    %v535 = vmul.f32 %v292, %v421
    %v536 = vmul.f32 %v296, %v423
    %v537 = vmul.f32 %v300, %v431
    %v538 = vmul.f32 %v304, %v439
    %v539 = vmul.f32 %v308, %v438
    %v540 = vmul.f32 %v312, %v440
    %v541 = vmul.f32 %v316, %v448
    %v542 = vmul.f32 %v320, %v456
    %v543 = vmul.f32 %v324, %v455
    %v544 = vmul.f32 %v328, %v457
    %v545 = vmul.f32 %v332, %v465
    %v546 = vmul.f32 %v336, %v473
    %v547 = vmul.f32 %v340, %v472
    %v548 = vmul.f32 %v344, %v474
    %v549 = vmul.f32 %v348, %v482
    %v550 = vmul.f32 %v352, %v490
    %v551 = vmul.f32 %v356, %v489
    %v552 = vmul.f32 %v360, %v491
    %v553 = vmul.f32 %v364, %v499
    %v554 = vmul.f32 %v368, %v507
    %v555 = vmul.f32 %v372, %v506
    %v556 = vmul.f32 %v376, %v508
    %v581 = vcombine.low %v533, %v534
    %v582 = vcombine.low %v535, %v536
    %v584 = vunpack.c.l.s4 1983009808
    %v585 = vunpack.c.0.s8 %v584
    %v586 = vlaneseq
    %v587 = vshrl.u32 %v586, 7
    %v588 = vsub.s32 %v585, %v587
    %v589 = vrot.slane %v581, %v588
    %v591 = vunpack.c.l.s4 1983009808
    %v592 = vunpack.c.0.s8 %v591
    %v593 = vlaneseq
    %v594 = vshrl.u32 %v593, 7
    %v595 = vsub.s32 %v592, %v594
    %v596 = vrot.slane %v582, %v595
    %v597 = vcombine.low %v589, %v596
    %v598 = vcombine.low %v537, %v538
    %v599 = vcombine.low %v539, %v540
    %v601 = vunpack.c.l.s4 1983009808
    %v602 = vunpack.c.0.s8 %v601
    %v603 = vlaneseq
    %v604 = vshrl.u32 %v603, 7
    %v605 = vsub.s32 %v602, %v604
    %v606 = vrot.slane %v598, %v605
    %v608 = vunpack.c.l.s4 1983009808
    %v609 = vunpack.c.0.s8 %v608
    %v610 = vlaneseq
    %v611 = vshrl.u32 %v610, 7
    %v612 = vsub.s32 %v609, %v611
    %v613 = vrot.slane %v599, %v612
    %v614 = vcombine.low %v606, %v613
    %v615 = vcombine.low %v541, %v542
    %v616 = vcombine.low %v543, %v544
    %v618 = vunpack.c.l.s4 1983009808
    %v619 = vunpack.c.0.s8 %v618
    %v620 = vlaneseq
    %v621 = vshrl.u32 %v620, 7
    %v622 = vsub.s32 %v619, %v621
    %v623 = vrot.slane %v615, %v622
    %v625 = vunpack.c.l.s4 1983009808
    %v626 = vunpack.c.0.s8 %v625
    %v627 = vlaneseq
    %v628 = vshrl.u32 %v627, 7
    %v629 = vsub.s32 %v626, %v628
    %v630 = vrot.slane %v616, %v629
    %v631 = vcombine.low %v623, %v630
    %v632 = vcombine.low %v545, %v546
    %v633 = vcombine.low %v547, %v548
    %v635 = vunpack.c.l.s4 1983009808
    %v636 = vunpack.c.0.s8 %v635
    %v637 = vlaneseq
    %v638 = vshrl.u32 %v637, 7
    %v639 = vsub.s32 %v636, %v638
    %v640 = vrot.slane %v632, %v639
    %v642 = vunpack.c.l.s4 1983009808
    %v643 = vunpack.c.0.s8 %v642
    %v644 = vlaneseq
    %v645 = vshrl.u32 %v644, 7
    %v646 = vsub.s32 %v643, %v645
    %v647 = vrot.slane %v633, %v646
    %v648 = vcombine.low %v640, %v647
    %v649 = vcombine.low %v549, %v550
    %v650 = vcombine.low %v551, %v552
    %v652 = vunpack.c.l.s4 1983009808
    %v653 = vunpack.c.0.s8 %v652
    %v654 = vlaneseq
    %v655 = vshrl.u32 %v654, 7
    %v656 = vsub.s32 %v653, %v655
    %v657 = vrot.slane %v649, %v656
    %v659 = vunpack.c.l.s4 1983009808
    %v660 = vunpack.c.0.s8 %v659
    %v661 = vlaneseq
    %v662 = vshrl.u32 %v661, 7
    %v663 = vsub.s32 %v660, %v662
    %v664 = vrot.slane %v650, %v663
    %v665 = vcombine.low %v657, %v664
    %v666 = vcombine.low %v553, %v554
    %v667 = vcombine.low %v555, %v556
    %v669 = vunpack.c.l.s4 1983009808
    %v670 = vunpack.c.0.s8 %v669
    %v671 = vlaneseq
    %v672 = vshrl.u32 %v671, 7
    %v673 = vsub.s32 %v670, %v672
    %v674 = vrot.slane %v666, %v673
    %v676 = vunpack.c.l.s4 1983009808
    %v677 = vunpack.c.0.s8 %v676
    %v678 = vlaneseq
    %v679 = vshrl.u32 %v678, 7
    %v680 = vsub.s32 %v677, %v679
    %v681 = vrot.slane %v667, %v680
    %v682 = vcombine.low %v674, %v681
    %689 = vst [vmem:[#allocation8] sm:$0xff] %v597
    %690 = vst [vmem:[#allocation8 + $0x8] sm:$0xff] %v614
    %691 = vst [vmem:[#allocation8 + $0x10] sm:$0xff] %v631
    %692 = vst [vmem:[#allocation8 + $0x18] sm:$0xff] %v648
    %693 = vst [vmem:[#allocation8 + $0x20] sm:$0xff] %v665
    %694 = vst [vmem:[#allocation8 + $0x28] sm:$0xff] %v682
    // Predicated region
    $region26: #{tpu_custom_call.1} parent=1 // pred_check
      _
    $region27: #{tpu_custom_call.1} parent=1 // pred_check_branch
      %696 = sbr.rel (0) target = $region29
    $region28: #{tpu_custom_call.1} parent=1 // pred_region
      %s698 = ssub.s32 768, 768
      %699 = vsyncadd [#allocation4], %s698
      %s701 = sshll.u32 [#allocation8], 4
      %s702 = int_to_ptr.vmem [resolvable:$true] %s701
      %704 = dma.vmem_to_hbm [thread:$0]  %s702, 768, %s3, [#allocation4]
    $region29: #{tpu_custom_call.1} parent=1 // pred_fallthru
      _
    // Predicated region
    $region30: #{tpu_custom_call.1} parent=1 // pred_check
      _
    $region31: #{tpu_custom_call.1} parent=1 // pred_check_branch
      %706 = sbr.rel (0) target = $region33
    $region32: #{tpu_custom_call.1} parent=1 // pred_region
      %707 = dma.done [#allocation4], 768
    $region33: #{tpu_custom_call.1} parent=1 // pred_fallthru
      _
    %708 = vsyncpa [#allocation3], 1
    %709 = vsyncpa [#allocation6], 1
    %710 = vsyncpa [#allocation4], 1

</llo_original>
